<compile_context>
chip_gen: v7x
topology: tpu7x:2x2x1
jax: 0.10.0
libtpu: 0.0.40
codegen_flags: <defaults>
</compile_context>

<pallas_src>
import functools

import jax
import jax.numpy as jnp
import numpy as np
from jax import lax
from jax.experimental import pallas as pl
from jax.experimental.pallas import tpu as pltpu


def _round_up(x, m):
    return ((x + m - 1) // m) * m


def _vmem_limit_bytes():
    """Generation-aware scoped-VMEM limit (~85% of physical VMEM)."""
    try:
        cap = pltpu.get_tpu_info().vmem_capacity_bytes
    except Exception:
        cap = 64 * 1024 * 1024          # conservative: safe on every generation
    return int(cap * 0.85)


# --------------------------- multi-scale kernel sum --------------------------
def _multiscale_kernel_sum(x, kernel_mul, kernel_num, use_bf16=False):
    """sum_{i=0}^{K-1} exp(x * kernel_mul**(-i)) with x = -L2/bw0 (<= 0).

    For kernel_mul == 2 uses repeated squaring:
        exp(x * 2^-(i-1)) == exp(x * 2^-i)^2
    so one real (EUP) exp per group of 4 scales; the rest are VALU squarings.
    Accumulation stays in f32.
    """
    assert kernel_num >= 1
    # TODO(synk): the opt-in bf16-exp path (v6e/v7x only, ~2x EUP throughput)
    # trades ~2^-8 relative accuracy; validate vs. the reference before
    # enabling by default.  Never enable on v5e (no bf16 EUP/VPU).
    xc = x.astype(jnp.bfloat16) if use_bf16 else x
    acc = None

    def _add(a, v):
        v32 = v.astype(jnp.float32)
        return v32 if a is None else a + v32

    if float(kernel_mul) == 2.0:
        group = 4
        i = kernel_num - 1
        while i >= 0:
            g = min(group, i + 1)
            k = jnp.exp(xc * (2.0 ** (-i)))          # scale i (EUP)
            acc = _add(acc, k)
            for _ in range(g - 1):                    # scales i-1 .. i-g+1 (VALU)
                k = k * k
                acc = _add(acc, k)
            i -= g
    else:
        for i in range(kernel_num):
            acc = _add(acc, jnp.exp(xc * (float(kernel_mul) ** (-i))))
    return acc


# ------------------------- single-block RBF MMD kernel -----------------------
def _rbf_single_kernel(total_ref, out_ref, *, batch, kernel_mul, kernel_num,
                       use_bf16_exp):
    n = 2 * batch
    total = total_ref[...]                                          # (n, d)

    # Gram on the MXU, contracting the feature dim of BOTH operands.
    gram = lax.dot_general(total, total,
                           dimension_numbers=(((1,), (1,)), ((), ())),
                           preferred_element_type=jnp.float32)      # (n, n)
    sq = jnp.sum(total * total, axis=1, keepdims=True)              # (n, 1)
    l2 = jnp.maximum(sq + jnp.transpose(sq) - 2.0 * gram, 0.0)      # (n, n)

    # Closed-form bandwidth: sum(L2) = 2n*sum||x||^2 - 2*||sum x||^2.
    sq_tot = jnp.sum(sq, axis=0, keepdims=True)                     # (1, 1)
    col = jnp.sum(total, axis=0, keepdims=True)                     # (1, d)
    col_sq = jnp.sum(col * col, axis=1, keepdims=True)              # (1, 1)
    l2_sum = 2.0 * float(n) * sq_tot - 2.0 * col_sq
    bw = l2_sum * (1.0 / float(n * n - n)) \
               * (1.0 / (kernel_mul ** (kernel_num // 2)))
    inv_bw = pl.reciprocal(bw)        # bw == 0 (degenerate input) -> inf, same as PyTorch
    x = l2 * (-inv_bw)                                              # one n x n mul

    ksum = _multiscale_kernel_sum(x, kernel_mul, kernel_num, use_bf16_exp)

    # Signed quadratic form: XX + YY - XY - YX == s^T K s / b^2.
    cols_i = lax.broadcasted_iota(jnp.int32, (1, n), 1)
    rows_i = lax.broadcasted_iota(jnp.int32, (n, 1), 0)
    s_col = jnp.where(cols_i < batch, 1.0, -1.0)
    s_row = jnp.where(rows_i < batch, 1.0, -1.0)
    v = jnp.sum(ksum * s_col, axis=1, keepdims=True)                # (n, 1)
    out_ref[...] = jnp.sum(v * s_row, axis=0, keepdims=True) \
                   * (1.0 / float(batch * batch))


# ------------------------ gridded RBF MMD (large batches) --------------------
def _bandwidth_stats_kernel(tile_ref, inv_bw_ref, sq_acc, col_acc, *,
                            n, kernel_mul, kernel_num):
    """Closed-form bandwidth from row-stripes of the (zero-padded) total."""
    s = pl.program_id(0)

    @pl.when(s == 0)
    def _():
        sq_acc[...] = jnp.zeros_like(sq_acc)
        col_acc[...] = jnp.zeros_like(col_acc)

    t = tile_ref[...]                                               # (ts, d)
    sq_acc[...] += jnp.sum(jnp.sum(t * t, axis=1, keepdims=True),
                           axis=0, keepdims=True)
    col_acc[...] += jnp.sum(t, axis=0, keepdims=True)

    @pl.when(s == pl.num_programs(0) - 1)
    def _():
        col_sq = jnp.sum(col_acc[...] * col_acc[...], axis=1, keepdims=True)
        l2_sum = 2.0 * float(n) * sq_acc[...] - 2.0 * col_sq
        bw = l2_sum * (1.0 / float(n * n - n)) \
                   * (1.0 / (kernel_mul ** (kernel_num // 2)))
        inv_bw_ref[...] = pl.reciprocal(bw)


def _rbf_pair_kernel(pair_i_ref, pair_j_ref,          # scalar prefetch (SMEM)
                     inv_bw_ref, rows_ref, cols_ref,  # inputs
                     out_ref,                         # (1,1,1) partial per pair
                     *, ts, batch, n, kernel_mul, kernel_num, use_bf16_exp):
    p = pl.program_id(0)
    ti = pair_i_ref[p]
    tj = pair_j_ref[p]

    rows = rows_ref[...]                                            # (ts, d)
    cols = cols_ref[...]                                            # (ts, d)
    gram = lax.dot_general(rows, cols,
                           dimension_numbers=(((1,), (1,)), ((), ())),
                           preferred_element_type=jnp.float32)      # (ts, ts)
    sq_r = jnp.sum(rows * rows, axis=1, keepdims=True)              # (ts, 1)
    sq_c = jnp.sum(cols * cols, axis=1, keepdims=True)              # (ts, 1)
    l2 = jnp.maximum(sq_r + jnp.transpose(sq_c) - 2.0 * gram, 0.0)

    x = l2 * (-inv_bw_ref[...])                                     # (1,1) bcast
    ksum = _multiscale_kernel_sum(x, kernel_mul, kernel_num, use_bf16_exp)

    # Signs: +1 source rows, -1 target rows, 0 padded rows.
    r_idx = ti * ts + lax.broadcasted_iota(jnp.int32, (ts, 1), 0)
    c_idx = tj * ts + lax.broadcasted_iota(jnp.int32, (1, ts), 1)
    s_row = jnp.where(r_idx < batch, 1.0, jnp.where(r_idx < n, -1.0, 0.0))
    s_col = jnp.where(c_idx < batch, 1.0, jnp.where(c_idx < n, -1.0, 0.0))

    v = jnp.sum(ksum * s_col, axis=1, keepdims=True)                # (ts, 1)
    contrib = jnp.sum(v * s_row, axis=0, keepdims=True)             # (1, 1)
    w = jnp.where(ti == tj, 1.0, 2.0)        # off-diag tiles count twice (K symmetry)
    out_ref[...] = (w * contrib).reshape(1, 1, 1)


def _rbf_mmd_gridded(total, batch, kernel_mul, kernel_num, block_rows,
                     use_bf16_exp, vmem_limit):
    n, d = total.shape                       # n = 2 * batch (unpadded)
    ts = int(block_rows)
    assert ts % 8 == 0
    num_stripes = -(-n // ts)
    npad = num_stripes * ts
    if npad != n:
        total = jnp.pad(total, ((0, npad - n), (0, 0)))   # zero rows -> sign 0

    # Stage 1: closed-form bandwidth (reduction axis "arbitrary").
    inv_bw = pl.pallas_call(
        functools.partial(_bandwidth_stats_kernel, n=n,
                          kernel_mul=kernel_mul, kernel_num=kernel_num),
        out_shape=jax.ShapeDtypeStruct((1, 1), jnp.float32),
        grid_spec=pltpu.PrefetchScalarGridSpec(
            num_scalar_prefetch=0,
            grid=(num_stripes,),
            in_specs=[pl.BlockSpec((ts, d), lambda s: (s, 0))],
            out_specs=pl.BlockSpec((1, 1), lambda s: (0, 0)),
            scratch_shapes=[pltpu.VMEM((1, 1), jnp.float32),
                            pltpu.VMEM((1, d), jnp.float32)]),
        compiler_params=pltpu.CompilerParams(
            dimension_semantics=("arbitrary",),
            vmem_limit_bytes=vmem_limit),
    )(total)

    # Stage 2: upper-triangular stripe pairs (I <= J), row-major so the row
    # tile's block index repeats and its DMA is skipped between steps.
    pairs = [(i, j) for i in range(num_stripes) for j in range(i, num_stripes)]
    pair_i = jnp.asarray(np.array([p[0] for p in pairs], dtype=np.int32))
    pair_j = jnp.asarray(np.array([p[1] for p in pairs], dtype=np.int32))
    num_pairs = len(pairs)

    kernel = functools.partial(
        _rbf_pair_kernel, ts=ts, batch=batch, n=n,
        kernel_mul=kernel_mul, kernel_num=kernel_num, use_bf16_exp=use_bf16_exp)
    partials = pl.pallas_call(
        kernel,
        out_shape=jax.ShapeDtypeStruct((num_pairs, 1, 1), jnp.float32),
        grid_spec=pltpu.PrefetchScalarGridSpec(
            num_scalar_prefetch=2,
            grid=(num_pairs,),
            in_specs=[pl.BlockSpec((1, 1), lambda p, pi, pj: (0, 0)),
                      pl.BlockSpec((ts, d), lambda p, pi, pj: (pi[p], 0)),
                      pl.BlockSpec((ts, d), lambda p, pi, pj: (pj[p], 0))],
            out_specs=pl.BlockSpec((1, 1, 1), lambda p, pi, pj: (p, 0, 0))),
        compiler_params=pltpu.CompilerParams(
            dimension_semantics=("parallel",),     # shards pairs across TCs (v7x)
            vmem_limit_bytes=vmem_limit),
    )(pair_i, pair_j, inv_bw, total, total)

    return jnp.sum(partials) * (1.0 / float(batch * batch))


# ------------------------------ linear MMD kernel ----------------------------
def _linear_mmd_kernel(src_ref, tgt_ref, out_ref):
    delta = (jnp.mean(src_ref[...].astype(jnp.float32), axis=0, keepdims=True)
             - jnp.mean(tgt_ref[...].astype(jnp.float32), axis=0,
                        keepdims=True))                              # (1, d)
    out_ref[...] = jnp.sum(delta * delta, axis=1, keepdims=True)     # (1, 1)


# ---------------------------------- wrapper ----------------------------------
def mmd_loss(source, target, kernel_type='rbf', kernel_mul=2.0, kernel_num=20,
             impl='auto', block_rows=256, use_bf16_exp=False):
    """JAX/Pallas equivalent of MMD_loss.forward(source, target).

    impl: 'auto' | 'single' (one n x n-resident kernel, small n)
                 | 'gridded' (row-stripe-pair grid, large n).
    block_rows: stripe size for the gridded path (multiple of 128 recommended;
                128 suffices on v5e, 256 is a good MXU tile on v6e/v7x).
    NOTE: for best efficiency align batch to a multiple of 64 (n = 2b is then
    a multiple of 128 lanes); tiny batches mostly compute on vreg padding.
    """
    source = jnp.asarray(source, jnp.float32)
    target = jnp.asarray(target, jnp.float32)
    b, d = source.shape
    assert target.shape == (b, d), "source/target must share shape (batch, feat)"

    vmem_spec = pl.BlockSpec(memory_space=pltpu.MemorySpace.VMEM)

    if kernel_type == 'linear':
        out = pl.pallas_call(
            _linear_mmd_kernel,
            out_shape=jax.ShapeDtypeStruct((1, 1), jnp.float32),
            in_specs=[vmem_spec, vmem_spec],
            out_specs=vmem_spec,
        )(source, target)
        return out[0, 0]

    if kernel_type != 'rbf':
        raise ValueError(f"unknown kernel_type: {kernel_type}")

    n = 2 * b
    # Concatenate in the wrapper (cheap XLA HBM copy) instead of an in-kernel
    # sublane relayout.
    total = jnp.concatenate([source, target], axis=0)
    vmem_limit = _vmem_limit_bytes()

    if impl == 'auto':
        # ~3 live n x n f32 buffers (x, k, ksum) + gram transient + total.
        npad_s = max(_round_up(n, 8), 8)
        npad_l = max(_round_up(n, 128), 128)
        dpad = max(_round_up(d, 128), 128)
        est = 4 * (4 * npad_s * npad_l + 3 * npad_s * dpad)
        impl = 'single' if 2 * est <= vmem_limit else 'gridded'
    if impl not in ('single', 'gridded'):
        raise ValueError(f"unknown impl: {impl}")

    km = float(kernel_mul)
    kn = int(kernel_num)

    if impl == 'single':
        kernel = functools.partial(_rbf_single_kernel, batch=b, kernel_mul=km,
                                   kernel_num=kn, use_bf16_exp=use_bf16_exp)
        out = pl.pallas_call(
            kernel,
            out_shape=jax.ShapeDtypeStruct((1, 1), jnp.float32),
            in_specs=[vmem_spec],
            out_specs=vmem_spec,
            compiler_params=pltpu.CompilerParams(vmem_limit_bytes=vmem_limit),
        )(total)
        return out[0, 0]

    return _rbf_mmd_gridded(total, b, km, kn, block_rows, use_bf16_exp,
                            vmem_limit)


# ----------------------- pure-JAX references (checks) ------------------------
def _mmd_rbf_ref(source, target, kernel_mul=2.0, kernel_num=20):
    b = source.shape[0]
    n = b + target.shape[0]
    total = jnp.concatenate([source, target], axis=0).astype(jnp.float32)
    l2 = jnp.sum((total[None, :, :] - total[:, None, :]) ** 2, axis=2)
    bw = jnp.sum(l2) / (n * n - n)
    bw = bw / (kernel_mul ** (kernel_num // 2))
    k = sum(jnp.exp(-l2 / (bw * kernel_mul ** i)) for i in range(kernel_num))
    return (jnp.mean(k[:b, :b]) + jnp.mean(k[b:, b:])
            - jnp.mean(k[:b, b:]) - jnp.mean(k[b:, :b]))


def _mmd_linear_ref(source, target):
    delta = jnp.mean(source.astype(jnp.float32), 0) - jnp.mean(
        target.astype(jnp.float32), 0)
    return jnp.dot(delta, delta)


# ------------------------------------ main ------------------------------------
if __name__ == "__main__":
    key = jax.random.PRNGKey(0)
    k1, k2, k3, k4 = jax.random.split(key, 4)

    # (1) rbf, small single-block path (module default config).
    B, D = 8, 32
    src = jax.random.normal(k1, (B, D), dtype=jnp.float32)
    tgt = 1.5 * jax.random.normal(k2, (B, D), dtype=jnp.float32) + 0.5
    loss_rbf = mmd_loss(src, tgt, kernel_type='rbf',
                        kernel_mul=2.0, kernel_num=20)
    jax.block_until_ready(loss_rbf)
    np.testing.assert_allclose(np.asarray(loss_rbf),
                               np.asarray(_mmd_rbf_ref(src, tgt)),
                               rtol=2e-3, atol=2e-4)

    # (2) rbf, gridded stripe-pair path (padding + tile symmetry + prefetch maps).
    B2, D2 = 80, 64
    src2 = jax.random.normal(k3, (B2, D2), dtype=jnp.float32)
    tgt2 = 0.8 * jax.random.normal(k4, (B2, D2), dtype=jnp.float32) - 0.25
    loss_rbf2 = mmd_loss(src2, tgt2, kernel_type='rbf', impl='gridded',
                         block_rows=128)
    jax.block_until_ready(loss_rbf2)
    np.testing.assert_allclose(np.asarray(loss_rbf2),
                               np.asarray(_mmd_rbf_ref(src2, tgt2)),
                               rtol=2e-3, atol=2e-4)

    # (3) linear path.
    loss_lin = mmd_loss(src, tgt, kernel_type='linear')
    jax.block_until_ready(loss_lin)
    np.testing.assert_allclose(np.asarray(loss_lin),
                               np.asarray(_mmd_linear_ref(src, tgt)),
                               rtol=1e-4, atol=1e-5)

    print("KERNEL_OK")
</pallas_src>

<mosaic_0001>
module attributes {stable_mosaic.version = 11 : i64} {
  func.func @_rbf_single_kernel(%arg0: memref<16x32xf32, #tpu.memory_space<vmem>>, %arg1: memref<1x1xf32, #tpu.memory_space<vmem>>) attributes {dimension_semantics = [], scalar_prefetch = 0 : i64, scratch_operands = 0 : i64, tpu.core_type = #tpu.core_type<tc>} {
    %c0 = arith.constant 0 : index
    %c0_0 = arith.constant 0 : index
    %0 = vector.load %arg0[%c0, %c0_0] : memref<16x32xf32, #tpu.memory_space<vmem>>, vector<16x32xf32>
    %cst = arith.constant dense<0.000000e+00> : vector<16x16xf32>
    %1 = tpu.matmul %0, %0, %cst {dimension_numbers = #tpu.dot_dimension_numbers<[1], [1], [0], [0], [0, 0, 1, 0], [], []>} : vector<16x32xf32>, vector<16x32xf32>, vector<16x16xf32> -> vector<16x16xf32>
    %2 = arith.mulf %0, %0 : vector<16x32xf32>
    %cst_1 = arith.constant dense<0.000000e+00> : vector<16xf32>
    %3 = vector.multi_reduction <add>, %2, %cst_1 [1] : vector<16x32xf32> to vector<16xf32>
    %4 = vector.shape_cast %3 : vector<16xf32> to vector<16x1xf32>
    %5 = tpu.transpose %4, [1, 0] : vector<16x1xf32> -> vector<1x16xf32>
    %6 = vector.broadcast %4 : vector<16x1xf32> to vector<16x16xf32>
    %7 = vector.broadcast %5 : vector<1x16xf32> to vector<16x16xf32>
    %8 = arith.addf %6, %7 : vector<16x16xf32>
    %cst_2 = arith.constant 2.000000e+00 : f32
    %9 = vector.broadcast %cst_2 : f32 to vector<16x16xf32>
    %10 = arith.mulf %9, %1 : vector<16x16xf32>
    %11 = arith.subf %8, %10 : vector<16x16xf32>
    %cst_3 = arith.constant 0.000000e+00 : f32
    %12 = vector.broadcast %cst_3 : f32 to vector<16x16xf32>
    %13 = arith.maximumf %11, %12 : vector<16x16xf32>
    %cst_4 = arith.constant dense<0.000000e+00> : vector<1xf32>
    %14 = vector.multi_reduction <add>, %4, %cst_4 [0] : vector<16x1xf32> to vector<1xf32>
    %15 = vector.shape_cast %14 : vector<1xf32> to vector<1x1xf32>
    %cst_5 = arith.constant dense<0.000000e+00> : vector<32xf32>
    %16 = vector.multi_reduction <add>, %0, %cst_5 [0] : vector<16x32xf32> to vector<32xf32>
    %17 = vector.shape_cast %16 : vector<32xf32> to vector<1x32xf32>
    %18 = arith.mulf %17, %17 : vector<1x32xf32>
    %cst_6 = arith.constant dense<0.000000e+00> : vector<1xf32>
    %19 = vector.multi_reduction <add>, %18, %cst_6 [1] : vector<1x32xf32> to vector<1xf32>
    %20 = vector.shape_cast %19 : vector<1xf32> to vector<1x1xf32>
    %cst_7 = arith.constant 3.200000e+01 : f32
    %21 = vector.broadcast %cst_7 : f32 to vector<1x1xf32>
    %22 = arith.mulf %21, %15 : vector<1x1xf32>
    %cst_8 = arith.constant 2.000000e+00 : f32
    %23 = vector.broadcast %cst_8 : f32 to vector<1x1xf32>
    %24 = arith.mulf %23, %20 : vector<1x1xf32>
    %25 = arith.subf %22, %24 : vector<1x1xf32>
    %cst_9 = arith.constant 0.00416666688 : f32
    %26 = vector.broadcast %cst_9 : f32 to vector<1x1xf32>
    %27 = arith.mulf %25, %26 : vector<1x1xf32>
    %cst_10 = arith.constant 9.765625E-4 : f32
    %28 = vector.broadcast %cst_10 : f32 to vector<1x1xf32>
    %29 = arith.mulf %27, %28 : vector<1x1xf32>
    %30 = tpu.reciprocal %29 : vector<1x1xf32> -> vector<1x1xf32>
    %cst_11 = arith.constant 0.000000e+00 : f32
    %31 = vector.broadcast %cst_11 : f32 to vector<1x1xf32>
    %32 = arith.subf %31, %30 : vector<1x1xf32>
    %33 = vector.broadcast %32 : vector<1x1xf32> to vector<16x16xf32>
    %34 = arith.mulf %13, %33 : vector<16x16xf32>
    %cst_12 = arith.constant 1.90734863E-6 : f32
    %35 = vector.broadcast %cst_12 : f32 to vector<16x16xf32>
    %36 = arith.mulf %34, %35 : vector<16x16xf32>
    %37 = math.exp %36 : vector<16x16xf32>
    %38 = arith.mulf %37, %37 : vector<16x16xf32>
    %39 = arith.addf %37, %38 : vector<16x16xf32>
    %40 = arith.mulf %38, %38 : vector<16x16xf32>
    %41 = arith.addf %39, %40 : vector<16x16xf32>
    %42 = arith.mulf %40, %40 : vector<16x16xf32>
    %43 = arith.addf %41, %42 : vector<16x16xf32>
    %cst_13 = arith.constant 3.05175781E-5 : f32
    %44 = vector.broadcast %cst_13 : f32 to vector<16x16xf32>
    %45 = arith.mulf %34, %44 : vector<16x16xf32>
    %46 = math.exp %45 : vector<16x16xf32>
    %47 = arith.addf %43, %46 : vector<16x16xf32>
    %48 = arith.mulf %46, %46 : vector<16x16xf32>
    %49 = arith.addf %47, %48 : vector<16x16xf32>
    %50 = arith.mulf %48, %48 : vector<16x16xf32>
    %51 = arith.addf %49, %50 : vector<16x16xf32>
    %52 = arith.mulf %50, %50 : vector<16x16xf32>
    %53 = arith.addf %51, %52 : vector<16x16xf32>
    %cst_14 = arith.constant 4.8828125E-4 : f32
    %54 = vector.broadcast %cst_14 : f32 to vector<16x16xf32>
    %55 = arith.mulf %34, %54 : vector<16x16xf32>
    %56 = math.exp %55 : vector<16x16xf32>
    %57 = arith.addf %53, %56 : vector<16x16xf32>
    %58 = arith.mulf %56, %56 : vector<16x16xf32>
    %59 = arith.addf %57, %58 : vector<16x16xf32>
    %60 = arith.mulf %58, %58 : vector<16x16xf32>
    %61 = arith.addf %59, %60 : vector<16x16xf32>
    %62 = arith.mulf %60, %60 : vector<16x16xf32>
    %63 = arith.addf %61, %62 : vector<16x16xf32>
    %cst_15 = arith.constant 7.812500e-03 : f32
    %64 = vector.broadcast %cst_15 : f32 to vector<16x16xf32>
    %65 = arith.mulf %34, %64 : vector<16x16xf32>
    %66 = math.exp %65 : vector<16x16xf32>
    %67 = arith.addf %63, %66 : vector<16x16xf32>
    %68 = arith.mulf %66, %66 : vector<16x16xf32>
    %69 = arith.addf %67, %68 : vector<16x16xf32>
    %70 = arith.mulf %68, %68 : vector<16x16xf32>
    %71 = arith.addf %69, %70 : vector<16x16xf32>
    %72 = arith.mulf %70, %70 : vector<16x16xf32>
    %73 = arith.addf %71, %72 : vector<16x16xf32>
    %cst_16 = arith.constant 1.250000e-01 : f32
    %74 = vector.broadcast %cst_16 : f32 to vector<16x16xf32>
    %75 = arith.mulf %34, %74 : vector<16x16xf32>
    %76 = math.exp %75 : vector<16x16xf32>
    %77 = arith.addf %73, %76 : vector<16x16xf32>
    %78 = arith.mulf %76, %76 : vector<16x16xf32>
    %79 = arith.addf %77, %78 : vector<16x16xf32>
    %80 = arith.mulf %78, %78 : vector<16x16xf32>
    %81 = arith.addf %79, %80 : vector<16x16xf32>
    %82 = arith.mulf %80, %80 : vector<16x16xf32>
    %83 = arith.addf %81, %82 : vector<16x16xf32>
    %84 = tpu.iota {dimensions = array<i32: 1>} : vector<1x16xi32>
    %85 = tpu.iota {dimensions = array<i32: 0>} : vector<16x1xi32>
    %c8_i32 = arith.constant 8 : i32
    %86 = vector.broadcast %c8_i32 : i32 to vector<1x16xi32>
    %87 = arith.cmpi slt, %84, %86 : vector<1x16xi32>
    %cst_17 = arith.constant 1.000000e+00 : f32
    %cst_18 = arith.constant -1.000000e+00 : f32
    %88 = vector.broadcast %cst_17 : f32 to vector<1x16xf32>
    %89 = vector.broadcast %cst_18 : f32 to vector<1x16xf32>
    %90 = arith.select %87, %88, %89 : vector<1x16xi1>, vector<1x16xf32>
    %c8_i32_19 = arith.constant 8 : i32
    %91 = vector.broadcast %c8_i32_19 : i32 to vector<16x1xi32>
    %92 = arith.cmpi slt, %85, %91 : vector<16x1xi32>
    %cst_20 = arith.constant 1.000000e+00 : f32
    %cst_21 = arith.constant -1.000000e+00 : f32
    %93 = vector.broadcast %cst_20 : f32 to vector<16x1xf32>
    %94 = vector.broadcast %cst_21 : f32 to vector<16x1xf32>
    %95 = arith.select %92, %93, %94 : vector<16x1xi1>, vector<16x1xf32>
    %96 = vector.broadcast %90 : vector<1x16xf32> to vector<16x16xf32>
    %97 = arith.mulf %83, %96 : vector<16x16xf32>
    %cst_22 = arith.constant dense<0.000000e+00> : vector<16xf32>
    %98 = vector.multi_reduction <add>, %97, %cst_22 [1] : vector<16x16xf32> to vector<16xf32>
    %99 = vector.shape_cast %98 : vector<16xf32> to vector<16x1xf32>
    %100 = arith.mulf %99, %95 : vector<16x1xf32>
    %cst_23 = arith.constant dense<0.000000e+00> : vector<1xf32>
    %101 = vector.multi_reduction <add>, %100, %cst_23 [0] : vector<16x1xf32> to vector<1xf32>
    %102 = vector.shape_cast %101 : vector<1xf32> to vector<1x1xf32>
    %cst_24 = arith.constant 1.562500e-02 : f32
    %103 = vector.broadcast %cst_24 : f32 to vector<1x1xf32>
    %104 = arith.mulf %102, %103 : vector<1x1xf32>
    %c0_25 = arith.constant 0 : index
    %c0_26 = arith.constant 0 : index
    %105 = vector.load %arg1[%c0_25, %c0_26] : memref<1x1xf32, #tpu.memory_space<vmem>>, vector<1x1xf32>
    tpu.vector_store %arg1[%c0_25, %c0_26], %104 {strides = array<i32>} : memref<1x1xf32, #tpu.memory_space<vmem>>, vector<1x1xf32>,
    return
  }
}

</mosaic_0001>

<llo_original>
// kernel: tpu_custom_call.1
$region0: #{tpu_custom_call.1}
  #allocation0 [shape = 'u32[]', space=smem, size = 0x4, offset = 0x4, fixed_abs, tag = 'smem constant byte address 0x4 - core index']
  #allocation1 [shape = 'u32[144,128]{1,0:T(1,128)}', space=vmem, size = 0x12000, scoped, tag = 'internal scratch']
  %s0 = inlined_call_operand.hbm [shape: f32[16,32], index: 0, kind: input, shape index: {}]
  %s1 = inlined_call_operand.hbm [shape: f32[1,1], index: 1, kind: output, shape index: {}]
  %s2 = sld [smem:[#allocation0]]
  $region18: #{tpu_custom_call.1} parent=0
    _
  %s4 = ssub.s32 1, %s2
  %s5 = scalar_select 0, %s4, %s2
  $region1: #{tpu_custom_call.1} parent=0
    #allocation2 [shape = 'u8[8192]{0}', space=vmem, size = 0x2000, scoped, tag = 'input window, operand 0, single buffered']
    #allocation3 [shape = 's32[1]{0}', space=sflag, size = 0x4, scoped, tag = 'scoped memory for tpu_custom_call.1']
    #allocation4 [shape = 's32[1]{0}', space=sflag, size = 0x4, scoped, tag = 'scoped memory for tpu_custom_call.1']
    #allocation5 [shape = 'u8[512]{0}', space=vmem, size = 0x400, scoped, tag = 'output window, operand 0, single buffered']
    %6 = vsyncpa [#allocation3], 0
    %7 = vsyncpa [#allocation4], 0
    // Predicated region
    $region2: #{tpu_custom_call.1} parent=1 // pred_check
      _
    $region3: #{tpu_custom_call.1} parent=1 // pred_check_branch
      %9 = sbr.rel (0) target = $region5
    $region4: #{tpu_custom_call.1} parent=1 // pred_region
      %s11 = ssub.s32 256, 256
      %12 = vsyncadd [#allocation3], %s11
      %s13 = sshll.u32 [#allocation2], 4
      %s14 = int_to_ptr.vmem [resolvable:$true] %s13
      %19 = dma.hbm_to_vmem [thread:$0]  %s0, 256, %s14, [#allocation3], 128, 128, 8
    $region5: #{tpu_custom_call.1} parent=1 // pred_fallthru
      _
    // Predicated region
    $region6: #{tpu_custom_call.1} parent=1 // pred_check
      _
    $region7: #{tpu_custom_call.1} parent=1 // pred_check_branch
      %21 = sbr.rel (0) target = $region9
    $region8: #{tpu_custom_call.1} parent=1 // pred_region
      %22 = dma.done [#allocation3], 256
    $region9: #{tpu_custom_call.1} parent=1 // pred_fallthru
      _
    %v23 = vld [vmem:[#allocation2] sm:$0xff]
    %v24 = vld [vmem:[#allocation2 + $0x8] sm:$0xff]
    %vm25 = vcmask 261120
    %v27 = vsel %vm25, %v23, 0
    %v30 = vsel %vm25, %v24, 0
    %32 = vmatprep.subr.mxu0 0.0
    %33 = vmatpush1.xpose.msra.mxu0 %v27
    %34 = vmatprep.subr.mxu0 0.0
    %35 = vmatpush1.xpose.msra.mxu0 %v30
    %36 = vmatprep.subr.mxu0 0.0
    %37 = vmatpush1.xpose.msra.mxu0 0.0
    %38 = vmatprep.subr.mxu0 0.0
    %39 = vmatpush1.xpose.msra.mxu0 0.0
    %40 = vmatprep.subr.mxu0 0.0
    %41 = vmatpush1.xpose.msra.mxu0 0.0
    %42 = vmatprep.subr.mxu0 0.0
    %43 = vmatpush1.xpose.msra.mxu0 0.0
    %44 = vmatprep.subr.mxu0 0.0
    %45 = vmatpush1.xpose.msra.mxu0 0.0
    %46 = vmatprep.subr.mxu0 0.0
    %47 = vmatpush1.xpose.msra.mxu0 0.0
    %48 = vmatprep.subr.mxu0 0.0
    %49 = vmatpush1.xpose.msra.mxu0 0.0
    %50 = vmatprep.subr.mxu0 0.0
    %51 = vmatpush1.xpose.msra.mxu0 0.0
    %52 = vmatprep.subr.mxu0 0.0
    %53 = vmatpush1.xpose.msra.mxu0 0.0
    %54 = vmatprep.subr.mxu0 0.0
    %55 = vmatpush1.xpose.msra.mxu0 0.0
    %56 = vmatprep.subr.mxu0 0.0
    %57 = vmatpush1.xpose.msra.mxu0 0.0
    %58 = vmatprep.subr.mxu0 0.0
    %59 = vmatpush1.xpose.msra.mxu0 0.0
    %60 = vmatprep.subr.mxu0 0.0
    %61 = vmatpush1.xpose.msra.mxu0 0.0
    %62 = vmatprep.subr.mxu0 0.0
    %63 = vmatpush1.xpose.msra.mxu0 0.0
    %64 = vmatprep.subr.mxu0 0.0
    %65 = vmatpush1.xpose.msra.mxu0 0.0
    %66 = vmatprep.subr.mxu0 0.0
    %67 = vmatpush1.xpose.msra.mxu0 0.0
    %68 = vmatprep.subr.mxu0 0.0
    %69 = vmatpush1.xpose.msra.mxu0 0.0
    %70 = vmatprep.subr.mxu0 0.0
    %71 = vmatpush1.xpose.msra.mxu0 0.0
    %72 = vmatprep.subr.mxu0 0.0
    %73 = vmatpush1.xpose.msra.mxu0 0.0
    %74 = vmatprep.subr.mxu0 0.0
    %75 = vmatpush1.xpose.msra.mxu0 0.0
    %76 = vmatprep.subr.mxu0 0.0
    %77 = vmatpush1.xpose.msra.mxu0 0.0
    %78 = vmatprep.subr.mxu0 0.0
    %79 = vmatpush1.xpose.msra.mxu0 0.0
    %80 = vmatprep.subr.mxu0 0.0
    %81 = vmatpush1.xpose.msra.mxu0 0.0
    %82 = vmatprep.subr.mxu0 0.0
    %83 = vmatpush1.xpose.msra.mxu0 0.0
    %84 = vmatprep.subr.mxu0 0.0
    %85 = vmatpush1.xpose.msra.mxu0 0.0
    %86 = vmatprep.subr.mxu0 0.0
    %87 = vmatpush1.xpose.msra.mxu0 0.0
    %88 = vmatprep.subr.mxu0 0.0
    %89 = vmatpush1.xpose.msra.mxu0 0.0
    %90 = vmatprep.subr.mxu0 0.0
    %91 = vmatpush1.xpose.msra.mxu0 0.0
    %92 = vmatprep.subr.mxu0 0.0
    %93 = vmatpush1.xpose.msra.mxu0 0.0
    %94 = vmatprep.subr.mxu0 0.0
    %95 = vmatpush1.xpose.msra.mxu0 0.0
    %96 = vmatprep.mubr.f32.mxu0 0.0
    %97 = vmatmul.mubr.f32.gmra.mrb[0].mxu0 %v27
    %v98 = vpop.f32.mrb[0].mxu0
    %v99 = vadd.f32 0.0, %v98
    %v100 = vpop.f32.mrb[0].mxu0
    %101 = vmatprep.mubr.f32.mxu0 0.0
    %102 = vmatmul.mubr.f32.gmra.mrb[0].mxu0 %v30
    %v103 = vpop.f32.mrb[0].mxu0
    %v104 = vadd.f32 0.0, %v103
    %v105 = vpop.f32.mrb[0].mxu0
    %106 = vdwg.mxu0
    %v107 = vmul.f32 %v23, %v23
    %v108 = vmul.f32 %v24, %v24
    %v109 = vsel %vm25, %v107, 0.0
    %110 = vadd.xlane.f32.xlu0 %v109
    %v111 = vpop.xlane.xlu0 %110
    %v112 = vsel %vm25, %v108, 0.0
    %113 = vadd.xlane.f32.xlu0 %v112
    %v114 = vpop.xlane.xlu0 %113
    %115 = vxpose.xlu0.b32.start [1/16] %v111, 128
    %116 = vxpose.xlu0.b32.cont [2/16] %v114, 128
    %117 = vxpose.xlu0.b32.cont [3/16] 0.0, 128
    %118 = vxpose.xlu0.b32.cont [4/16] 0.0, 128
    %119 = vxpose.xlu0.b32.cont [5/16] 0.0, 128
    %120 = vxpose.xlu0.b32.cont [6/16] 0.0, 128
    %121 = vxpose.xlu0.b32.cont [7/16] 0.0, 128
    %122 = vxpose.xlu0.b32.cont [8/16] 0.0, 128
    %123 = vxpose.xlu0.b32.cont [9/16] 0.0, 128
    %124 = vxpose.xlu0.b32.cont [10/16] 0.0, 128
    %125 = vxpose.xlu0.b32.cont [11/16] 0.0, 128
    %126 = vxpose.xlu0.b32.cont [12/16] 0.0, 128
    %127 = vxpose.xlu0.b32.cont [13/16] 0.0, 128
    %128 = vxpose.xlu0.b32.cont [14/16] 0.0, 128
    %129 = vxpose.xlu0.b32.cont [15/16] 0.0, 128
    %130 = vxpose.xlu0.b32.end [16/16] 0.0, 128
    %v131 = vpop.trf.xlu0
    %v132 = vpop.trf.xlu0
    %v133 = vpop.trf.xlu0
    %v134 = vpop.trf.xlu0
    %v135 = vpop.trf.xlu0
    %v136 = vpop.trf.xlu0
    %v137 = vpop.trf.xlu0
    %v138 = vpop.trf.xlu0
    %v139 = vpop.trf.xlu0
    %v140 = vpop.trf.xlu0
    %v141 = vpop.trf.xlu0
    %v142 = vpop.trf.xlu0
    %v143 = vpop.trf.xlu0
    %v144 = vpop.trf.xlu0
    %v145 = vpop.trf.xlu0
    %v146 = vpop.trf.xlu0
    %v147 = vlaneseq
    %v148 = vshrl.u32 %v147, 7
    %v149 = vsub.s32 0, %v148
    %v150 = vrot.slane %v131, %v149
    %v151 = vadd.f32 %v111, %v150
    %v152 = vadd.f32 %v114, %v150
    %v153 = vmul.f32 %v99, 2.0
    %v154 = vmul.f32 %v104, 2.0
    %v155 = vsub.f32 %v151, %v153
    %v156 = vsub.f32 %v152, %v154
    %v157 = vmax.f32 %v155, 0.0
    %v158 = vmax.f32 %v156, 0.0
    %v159 = vadd.f32 %v111, %v114
    %v160 = vrot.slane %v159, 4
    %v161 = vadd.f32 %v159, %v160
    %v162 = vrot.slane %v161, 2
    %v163 = vadd.f32 %v161, %v162
    %v164 = vrot.slane %v163, 1
    %v165 = vadd.f32 %v163, %v164
    %v166 = vsel %vm25, %v23, 0.0
    %v167 = vsel %vm25, %v24, 0.0
    %v168 = vadd.f32 %v166, %v167
    %v169 = vrot.slane %v168, 4
    %v170 = vadd.f32 %v168, %v169
    %v171 = vrot.slane %v170, 2
    %v172 = vadd.f32 %v170, %v171
    %v173 = vrot.slane %v172, 1
    %v174 = vadd.f32 %v172, %v173
    %v175 = vmul.f32 %v174, %v174
    %v176 = vsel %vm25, %v175, 0.0
    %177 = vadd.xlane.f32.xlu0 %v176
    %v178 = vpop.xlane.xlu0 %177
    %v179 = vmul.f32 %v165, 32.0
    %v180 = vmul.f32 %v178, 2.0
    %v181 = vsub.f32 %v179, %v180
    %v182 = vmul.f32 %v181, 0.004166667
    %v183 = vmul.f32 %v182, 0.0009765625
    %v184 = vrcp.pop %v183
    %v185 = vsub.f32 0.0, %v184
    %v186 = vmul.f32 %v157, %v185
    %v187 = vmul.f32 %v158, %v185
    %v188 = vmul.f32 %v186, 1.9073486e-06
    %v189 = vmul.f32 %v187, 1.9073486e-06
    %v190 = vmul.f32 %v188, 1.442695
    %v191 = vpow.pop %v190
    %v192 = vmul.f32 %v189, 1.442695
    %v193 = vpow.pop %v192
    %v194 = vmul.f32 %v191, %v191
    %v195 = vmul.f32 %v193, %v193
    %v196 = vadd.f32 %v191, %v194
    %v197 = vadd.f32 %v193, %v195
    %v198 = vmul.f32 %v194, %v194
    %v199 = vmul.f32 %v195, %v195
    %v200 = vadd.f32 %v196, %v198
    %v201 = vadd.f32 %v197, %v199
    %v202 = vmul.f32 %v198, %v198
    %v203 = vmul.f32 %v199, %v199
    %v204 = vadd.f32 %v200, %v202
    %v205 = vadd.f32 %v201, %v203
    %v206 = vmul.f32 %v186, 3.0517578e-05
    %v207 = vmul.f32 %v187, 3.0517578e-05
    %v208 = vmul.f32 %v206, 1.442695
    %v209 = vpow.pop %v208
    %v210 = vmul.f32 %v207, 1.442695
    %v211 = vpow.pop %v210
    %v212 = vadd.f32 %v204, %v209
    %v213 = vadd.f32 %v205, %v211
    %v214 = vmul.f32 %v209, %v209
    %v215 = vmul.f32 %v211, %v211
    %v216 = vadd.f32 %v212, %v214
    %v217 = vadd.f32 %v213, %v215
    %v218 = vmul.f32 %v214, %v214
    %v219 = vmul.f32 %v215, %v215
    %v220 = vadd.f32 %v216, %v218
    %v221 = vadd.f32 %v217, %v219
    %v222 = vmul.f32 %v218, %v218
    %v223 = vmul.f32 %v219, %v219
    %v224 = vadd.f32 %v220, %v222
    %v225 = vadd.f32 %v221, %v223
    %v226 = vmul.f32 %v186, 0.00048828125
    %v227 = vmul.f32 %v187, 0.00048828125
    %v228 = vmul.f32 %v226, 1.442695
    %v229 = vpow.pop %v228
    %v230 = vmul.f32 %v227, 1.442695
    %v231 = vpow.pop %v230
    %v232 = vadd.f32 %v224, %v229
    %v233 = vadd.f32 %v225, %v231
    %v234 = vmul.f32 %v229, %v229
    %v235 = vmul.f32 %v231, %v231
    %v236 = vadd.f32 %v232, %v234
    %v237 = vadd.f32 %v233, %v235
    %v238 = vmul.f32 %v234, %v234
    %v239 = vmul.f32 %v235, %v235
    %v240 = vadd.f32 %v236, %v238
    %v241 = vadd.f32 %v237, %v239
    %v242 = vmul.f32 %v238, %v238
    %v243 = vmul.f32 %v239, %v239
    %v244 = vadd.f32 %v240, %v242
    %v245 = vadd.f32 %v241, %v243
    %v246 = vmul.f32 %v186, 0.0078125
    %v247 = vmul.f32 %v187, 0.0078125
    %v248 = vmul.f32 %v246, 1.442695
    %v249 = vpow.pop %v248
    %v250 = vmul.f32 %v247, 1.442695
    %v251 = vpow.pop %v250
    %v252 = vadd.f32 %v244, %v249
    %v253 = vadd.f32 %v245, %v251
    %v254 = vmul.f32 %v249, %v249
    %v255 = vmul.f32 %v251, %v251
    %v256 = vadd.f32 %v252, %v254
    %v257 = vadd.f32 %v253, %v255
    %v258 = vmul.f32 %v254, %v254
    %v259 = vmul.f32 %v255, %v255
    %v260 = vadd.f32 %v256, %v258
    %v261 = vadd.f32 %v257, %v259
    %v262 = vmul.f32 %v258, %v258
    %v263 = vmul.f32 %v259, %v259
    %v264 = vadd.f32 %v260, %v262
    %v265 = vadd.f32 %v261, %v263
    %v266 = vmul.f32 %v186, 0.125
    %v267 = vmul.f32 %v187, 0.125
    %v268 = vmul.f32 %v266, 1.442695
    %v269 = vpow.pop %v268
    %v270 = vmul.f32 %v267, 1.442695
    %v271 = vpow.pop %v270
    %v272 = vadd.f32 %v264, %v269
    %v273 = vadd.f32 %v265, %v271
    %v274 = vmul.f32 %v269, %v269
    %v275 = vmul.f32 %v271, %v271
    %v276 = vadd.f32 %v272, %v274
    %v277 = vadd.f32 %v273, %v275
    %v278 = vmul.f32 %v274, %v274
    %v279 = vmul.f32 %v275, %v275
    %v280 = vadd.f32 %v276, %v278
    %v281 = vadd.f32 %v277, %v279
    %v282 = vmul.f32 %v278, %v278
    %v283 = vmul.f32 %v279, %v279
    %v284 = vadd.f32 %v280, %v282
    %v285 = vadd.f32 %v281, %v283
    %v286 = vlaneseq
    %v287 = vand.u32 %v286, 127
    %v288 = vlaneseq
    %v289 = vshrl.u32 %v288, 7
    %v290 = vadd.s32 %v289, 8
    %vm291 = vcmp.lt.s32.totalorder %v287, 8
    %v292 = vsel %vm291, 1.0, -1.0
    %vm293 = vcmp.lt.s32.totalorder %v289, 8
    %vm294 = vcmp.lt.s32.totalorder %v290, 8
    %v295 = vsel %vm293, 1.0, -1.0
    %v296 = vsel %vm294, 1.0, -1.0
    %v297 = vmul.f32 %v284, %v292
    %v298 = vmul.f32 %v285, %v292
    %vm299 = vcmask 130048
    %v300 = vsel %vm299, %v297, 0.0
    %301 = vadd.xlane.f32.xlu0 %v300
    %v302 = vpop.xlane.xlu0 %301
    %v303 = vsel %vm299, %v298, 0.0
    %304 = vadd.xlane.f32.xlu0 %v303
    %v305 = vpop.xlane.xlu0 %304
    %v306 = vmul.f32 %v302, %v295
    %v307 = vmul.f32 %v305, %v296
    %v308 = vadd.f32 %v306, %v307
    %v309 = vrot.slane %v308, 4
    %v310 = vadd.f32 %v308, %v309
    %v311 = vrot.slane %v310, 2
    %v312 = vadd.f32 %v310, %v311
    %v313 = vrot.slane %v312, 1
    %v314 = vadd.f32 %v312, %v313
    %v315 = vmul.f32 %v314, 0.015625
    %vm316 = vcmask 0
    %317 = vst.msk [vmem:[#allocation5] sm:$0x1] %vm316, %v315
    // Predicated region
    $region10: #{tpu_custom_call.1} parent=1 // pred_check
      _
    $region11: #{tpu_custom_call.1} parent=1 // pred_check_branch
      %319 = sbr.rel (0) target = $region13
    $region12: #{tpu_custom_call.1} parent=1 // pred_region
      %s321 = ssub.s32 16, 16
      %322 = vsyncadd [#allocation4], %s321
      %s324 = sshll.u32 [#allocation5], 4
      %s325 = int_to_ptr.vmem [resolvable:$true] %s324
      %327 = dma.vmem_to_hbm [thread:$0]  %s325, 16, %s1, [#allocation4]
    $region13: #{tpu_custom_call.1} parent=1 // pred_fallthru
      _
    // Predicated region
    $region14: #{tpu_custom_call.1} parent=1 // pred_check
      _
    $region15: #{tpu_custom_call.1} parent=1 // pred_check_branch
      %329 = sbr.rel (0) target = $region17
    $region16: #{tpu_custom_call.1} parent=1 // pred_region
      %330 = dma.done [#allocation4], 16
    $region17: #{tpu_custom_call.1} parent=1 // pred_fallthru
      _
    %331 = vsyncpa [#allocation3], 1
    %332 = vsyncpa [#allocation4], 1

</llo_original>
